<compile_context>
chip_gen: v5e
topology: v5e:2x2
jax: 0.10.0
libtpu: 0.0.40
codegen_flags: <defaults>
</compile_context>

<pallas_src>
import functools
import math

import jax
import jax.numpy as jnp
import numpy as np
from jax.experimental import pallas as pl
from jax.experimental.pallas import tpu as pltpu


def _compute_u(L, attn_factor):
    U = min(L, int(attn_factor * math.log(L)) if L > 1 else L)
    # torch.topk(scores, 0) would error in the original module; clamp to 1 so
    # the kernel stays well-defined for tiny L / small attn_factor.
    return max(U, 1)


def _pick_tq(L):
    for tq in (256, 128, 64, 32, 16, 8):
        if L % tq == 0:
            return tq
    return L


# --------------------------------------------------------------------------
# Fused kernel: one (batch, query-tile) slice per grid step.
# --------------------------------------------------------------------------
def _fused_probsparse_kernel(x_ref, wq_ref, bq_ref, wkv_ref, bkv_ref,
                             wo_ref, bo_ref, o_ref, kv_ref, ctx_ref,
                             *, H, D, U, TQ):
    t = pl.program_id(1)
    L = x_ref.shape[0]
    d_model = H * D
    NEG = jnp.float32(-1e30)

    # ---- full-sequence K/V (all heads), computed once per batch, persistent
    #      in VMEM across every query tile of that batch.
    @pl.when(t == 0)
    def _():
        kv_ref[...] = (jnp.dot(x_ref[...], wkv_ref[...],
                               preferred_element_type=jnp.float32)
                       + bkv_ref[...])

    # ---- Q projection for this query tile only (1/sqrt(D) already folded
    #      into wq/bq by the wrapper).
    row0 = pl.multiple_of(t * TQ, TQ)
    x_tile = x_ref[pl.ds(row0, TQ), :]
    q_all = (jnp.dot(x_tile, wq_ref[...], preferred_element_type=jnp.float32)
             + bq_ref[...])                                    # (TQ, d_model)

    kv = kv_ref[...]                                           # (L, 2*d_model)
    u_f = jnp.float32(U)

    # Static head loop: H is small, so lane slices at h*D are static offsets.
    for h in range(H):
        q = q_all[:, h * D:(h + 1) * D]                        # (TQ, D)
        k = kv[:, h * D:(h + 1) * D]                           # (L,  D)
        v = kv[:, d_model + h * D:d_model + (h + 1) * D]       # (L,  D)

        # scores = (Q / sqrt(D)) @ K^T  -> (TQ, L)
        s = jax.lax.dot_general(q, k, (((1,), (1,)), ((), ())),
                                preferred_element_type=jnp.float32)

        # Row max doubles as peel iteration 0's max AND the softmax max.
        m = jnp.max(s, axis=-1, keepdims=True)

        if U < L:
            # "Peel the max": after U max-peels, thr equals
            # torch.topk(s, U)[..., -1, None] (ties counted). Iter 0 hoisted.
            is_max = s == m
            cnt = jnp.sum(is_max.astype(jnp.float32), axis=-1, keepdims=True)
            thr = m
            s_work = jnp.where(is_max, NEG, s)

            if U > 1:
                def peel(_, carry):
                    s_w, thr_c, cnt_c = carry
                    row_max = jnp.max(s_w, axis=-1, keepdims=True)  # XLU
                    is_mx = s_w == row_max
                    n_mx = jnp.sum(is_mx.astype(jnp.float32), axis=-1,
                                   keepdims=True)
                    thr_c = jnp.where(cnt_c < u_f, row_max, thr_c)
                    cnt_c = cnt_c + n_mx
                    s_w = jnp.where(is_mx, NEG, s_w)
                    return s_w, thr_c, cnt_c

                _, thr, _ = jax.lax.fori_loop(0, U - 1, peel,
                                              (s_work, thr, cnt),
                                              unroll=(U - 1) <= 8)

            # masked_fill(scores < top_k[..., -1, None], -inf)
            s = jnp.where(s < thr, NEG, s)
        # else: U == L -> threshold is the row min; mask is a no-op.

        # softmax (dropout = identity); denominator via EUP reciprocal.
        p = jnp.exp(s - m)
        p = p * pl.reciprocal(jnp.sum(p, axis=-1, keepdims=True), approx=True)

        # Head context written into its lane slice of the ctx scratch.
        ctx_ref[:, h * D:(h + 1) * D] = jnp.dot(
            p, v, preferred_element_type=jnp.float32)

    # ---- one fused, full contraction-depth output projection.
    o_ref[...] = (jnp.dot(ctx_ref[...], wo_ref[...],
                          preferred_element_type=jnp.float32)
                  + bo_ref[...]).astype(o_ref.dtype)


# --------------------------------------------------------------------------
# Forward-pass wrapper: one pallas_call for the whole module.
# --------------------------------------------------------------------------
def probsparse_self_attention(x, params, nhead, attn_factor, tq=None):
    B, L, d_model = x.shape
    H = nhead
    D = d_model // H
    U = _compute_u(L, attn_factor)
    TQ = _pick_tq(L) if tq is None else tq
    assert L % TQ == 0, "query tile size must divide L"

    # One-time weight prep: fold 1/sqrt(D) into Wq/bq, fuse K|V weights.
    scale = 1.0 / math.sqrt(D)
    wq_s = params["wq"] * scale
    bq_s = params["bq"] * scale
    wkv = jnp.concatenate([params["wk"], params["wv"]], axis=1)
    bkv = jnp.concatenate([params["bk"], params["bv"]], axis=1)

    kern = functools.partial(_fused_probsparse_kernel, H=H, D=D, U=U, TQ=TQ)

    return pl.pallas_call(
        kern,
        out_shape=jax.ShapeDtypeStruct((B, L, d_model), x.dtype),
        grid=(B, L // TQ),
        in_specs=[
            # x: full sequence, resident per batch (constant index over t).
            pl.BlockSpec((None, L, d_model), lambda b, t: (b, 0, 0)),
            pl.BlockSpec((d_model, d_model), lambda b, t: (0, 0)),      # Wq*s
            pl.BlockSpec((1, d_model), lambda b, t: (0, 0)),            # bq*s
            pl.BlockSpec((d_model, 2 * d_model), lambda b, t: (0, 0)),  # W[k|v]
            pl.BlockSpec((1, 2 * d_model), lambda b, t: (0, 0)),        # b[k|v]
            pl.BlockSpec((d_model, d_model), lambda b, t: (0, 0)),      # Wo
            pl.BlockSpec((1, d_model), lambda b, t: (0, 0)),            # bo
        ],
        out_specs=pl.BlockSpec((None, TQ, d_model), lambda b, t: (b, t, 0)),
        scratch_shapes=[
            pltpu.VMEM((L, 2 * d_model), jnp.float32),  # persistent K|V
            pltpu.VMEM((TQ, d_model), jnp.float32),     # per-tile context
        ],
        compiler_params=pltpu.CompilerParams(
            # B is megacore-parallel; the q-tile axis is "arbitrary" because
            # the K/V scratch is carried across tiles of the same batch.
            dimension_semantics=("parallel", "arbitrary"),
            # TODO(synk): tune per chip (~96-100 MiB on v5e/v6e is safe).
            vmem_limit_bytes=56 * 1024 * 1024,
        ),
    )(x, wq_s, bq_s, wkv, bkv, params["wo"], params["bo"])


# --------------------------------------------------------------------------
# Pure-JAX reference (mirrors the PyTorch forward, mask=None, eval dropout).
# --------------------------------------------------------------------------
def reference(x, params, nhead, attn_factor):
    B, L, d_model = x.shape
    H = nhead
    D = d_model // H
    U = _compute_u(L, attn_factor)

    def lin(t, w, b):
        return t @ w + b

    def heads(t):
        return t.reshape(B, L, H, D).transpose(0, 2, 1, 3)

    q = heads(lin(x, params["wq"], params["bq"]))
    k = heads(lin(x, params["wk"], params["bk"]))
    v = heads(lin(x, params["wv"], params["bv"]))
    scores = jnp.einsum("bhqd,bhkd->bhqk", q, k) / math.sqrt(D)
    top_vals, _ = jax.lax.top_k(scores, U)
    thr = top_vals[..., -1:]
    scores = jnp.where(scores < thr, -jnp.inf, scores)
    attn = jax.nn.softmax(scores, axis=-1)
    ctx = jnp.einsum("bhqk,bhkd->bhqd", attn, v).transpose(0, 2, 1, 3)
    ctx = ctx.reshape(B, L, d_model)
    return lin(ctx, params["wo"], params["bo"])


# --------------------------------------------------------------------------
if __name__ == "__main__":
    # Small shapes; L=16 with tq=8 gives 2 query tiles per batch, exercising
    # the persistent-KV / pl.when(t == 0) path and the query-tile grid axis.
    B, L, d_model, nhead, attn_factor = 2, 16, 32, 4, 1

    key = jax.random.PRNGKey(0)
    keys = jax.random.split(key, 9)
    bound = 1.0 / math.sqrt(d_model)

    def init_w(k):
        return jax.random.uniform(k, (d_model, d_model), jnp.float32, -bound, bound)

    def init_b(k):
        return jax.random.uniform(k, (1, d_model), jnp.float32, -bound, bound)

    params = {
        "wq": init_w(keys[0]), "bq": init_b(keys[1]),
        "wk": init_w(keys[2]), "bk": init_b(keys[3]),
        "wv": init_w(keys[4]), "bv": init_b(keys[5]),
        "wo": init_w(keys[6]), "bo": init_b(keys[7]),
    }
    x = jax.random.normal(keys[8], (B, L, d_model), jnp.float32)

    out = probsparse_self_attention(x, params, nhead, attn_factor, tq=8)
    out = jax.block_until_ready(out)

    ref = reference(x, params, nhead, attn_factor)
    assert out.shape == (B, L, d_model)
    assert np.allclose(np.asarray(out), np.asarray(ref), rtol=1e-3, atol=1e-3)

    print("KERNEL_OK")
</pallas_src>

<mosaic_0001>
module attributes {stable_mosaic.version = 11 : i64} {
  func.func @_fused_probsparse_kernel(%arg0: i32, %arg1: i32, %arg2: memref<1x16x32xf32, #tpu.memory_space<vmem>>, %arg3: memref<32x32xf32, #tpu.memory_space<vmem>>, %arg4: memref<1x32xf32, #tpu.memory_space<vmem>>, %arg5: memref<32x64xf32, #tpu.memory_space<vmem>>, %arg6: memref<1x64xf32, #tpu.memory_space<vmem>>, %arg7: memref<32x32xf32, #tpu.memory_space<vmem>>, %arg8: memref<1x32xf32, #tpu.memory_space<vmem>>, %arg9: memref<1x8x32xf32, #tpu.memory_space<vmem>>, %arg10: memref<16x64xf32, #tpu.memory_space<vmem>>, %arg11: memref<8x32xf32, #tpu.memory_space<vmem>>) attributes {dimension_semantics = [#tpu.dimension_semantics<parallel>, #tpu.dimension_semantics<arbitrary>], iteration_bounds = array<i64: 2, 2>, scalar_prefetch = 0 : i64, scratch_operands = 2 : i64, tpu.core_type = #tpu.core_type<tc>, window_params = [{transform_indices = @transform_0, window_bounds = array<i64: 1, 16, 32>}, {pipeline_mode = #tpu.pipeline_mode<synchronous>, transform_indices = @transform_1, window_bounds = array<i64: 32, 32>}, {pipeline_mode = #tpu.pipeline_mode<synchronous>, transform_indices = @transform_2, window_bounds = array<i64: 1, 32>}, {pipeline_mode = #tpu.pipeline_mode<synchronous>, transform_indices = @transform_3, window_bounds = array<i64: 32, 64>}, {pipeline_mode = #tpu.pipeline_mode<synchronous>, transform_indices = @transform_4, window_bounds = array<i64: 1, 64>}, {pipeline_mode = #tpu.pipeline_mode<synchronous>, transform_indices = @transform_5, window_bounds = array<i64: 32, 32>}, {pipeline_mode = #tpu.pipeline_mode<synchronous>, transform_indices = @transform_6, window_bounds = array<i64: 1, 32>}, {transform_indices = @transform_7, window_bounds = array<i64: 1, 8, 32>}]} {
    %c0_i32 = arith.constant 0 : i32
    %0 = arith.cmpi eq, %arg1, %c0_i32 : i32
    %1 = arith.extui %0 : i1 to i32
    %c0_i32_0 = arith.constant 0 : i32
    %2 = arith.cmpi ne, %1, %c0_i32_0 : i32
    scf.if %2 {
      %c0_71 = arith.constant 0 : index
      %c0_72 = arith.constant 0 : index
      %c0_73 = arith.constant 0 : index
      %191 = vector.load %arg2[%c0_71, %c0_72, %c0_73] : memref<1x16x32xf32, #tpu.memory_space<vmem>>, vector<1x16x32xf32>
      %192 = vector.shape_cast %191 : vector<1x16x32xf32> to vector<16x32xf32>
      %c0_74 = arith.constant 0 : index
      %c0_75 = arith.constant 0 : index
      %193 = vector.load %arg5[%c0_74, %c0_75] : memref<32x64xf32, #tpu.memory_space<vmem>>, vector<32x64xf32>
      %cst_76 = arith.constant dense<0.000000e+00> : vector<16x64xf32>
      %194 = tpu.matmul %192, %193, %cst_76 {dimension_numbers = #tpu.dot_dimension_numbers<[1], [0], [0], [1], [0, 0, 1, 1], [], []>} : vector<16x32xf32>, vector<32x64xf32>, vector<16x64xf32> -> vector<16x64xf32>
      %c0_77 = arith.constant 0 : index
      %c0_78 = arith.constant 0 : index
      %195 = vector.load %arg6[%c0_77, %c0_78] : memref<1x64xf32, #tpu.memory_space<vmem>>, vector<1x64xf32>
      %196 = vector.broadcast %195 : vector<1x64xf32> to vector<16x64xf32>
      %197 = arith.addf %194, %196 : vector<16x64xf32>
      %c0_79 = arith.constant 0 : index
      %c0_80 = arith.constant 0 : index
      %198 = vector.load %arg10[%c0_79, %c0_80] : memref<16x64xf32, #tpu.memory_space<vmem>>, vector<16x64xf32>
      tpu.vector_store %arg10[%c0_79, %c0_80], %197 {strides = array<i32>} : memref<16x64xf32, #tpu.memory_space<vmem>>, vector<16x64xf32>,
    } else {
    }
    %c8_i32 = arith.constant 8 : i32
    %3 = arith.muli %arg1, %c8_i32 : i32
    %4 = tpu.assume_multiple %3, 8 : i32
    %c0 = arith.constant 0 : index
    %5 = arith.index_cast %4 : i32 to index
    %c0_1 = arith.constant 0 : index
    %6 = vector.load %arg2[%c0, %5, %c0_1] : memref<1x16x32xf32, #tpu.memory_space<vmem>>, vector<1x8x32xf32>
    %7 = vector.shape_cast %6 : vector<1x8x32xf32> to vector<8x32xf32>
    %c0_2 = arith.constant 0 : index
    %c0_3 = arith.constant 0 : index
    %8 = vector.load %arg3[%c0_2, %c0_3] : memref<32x32xf32, #tpu.memory_space<vmem>>, vector<32x32xf32>
    %cst = arith.constant dense<0.000000e+00> : vector<8x32xf32>
    %9 = tpu.matmul %7, %8, %cst {dimension_numbers = #tpu.dot_dimension_numbers<[1], [0], [0], [1], [0, 0, 1, 1], [], []>} : vector<8x32xf32>, vector<32x32xf32>, vector<8x32xf32> -> vector<8x32xf32>
    %c0_4 = arith.constant 0 : index
    %c0_5 = arith.constant 0 : index
    %10 = vector.load %arg4[%c0_4, %c0_5] : memref<1x32xf32, #tpu.memory_space<vmem>>, vector<1x32xf32>
    %11 = vector.broadcast %10 : vector<1x32xf32> to vector<8x32xf32>
    %12 = arith.addf %9, %11 : vector<8x32xf32>
    %c0_6 = arith.constant 0 : index
    %c0_7 = arith.constant 0 : index
    %13 = vector.load %arg10[%c0_6, %c0_7] : memref<16x64xf32, #tpu.memory_space<vmem>>, vector<16x64xf32>
    %14 = vector.extract_strided_slice %12 {offsets = [0, 0], sizes = [8, 8], strides = [1, 1]} : vector<8x32xf32> to vector<8x8xf32>
    %15 = vector.extract_strided_slice %13 {offsets = [0, 0], sizes = [16, 8], strides = [1, 1]} : vector<16x64xf32> to vector<16x8xf32>
    %16 = vector.extract_strided_slice %13 {offsets = [0, 32], sizes = [16, 8], strides = [1, 1]} : vector<16x64xf32> to vector<16x8xf32>
    %cst_8 = arith.constant dense<0.000000e+00> : vector<8x16xf32>
    %17 = tpu.matmul %14, %15, %cst_8 {dimension_numbers = #tpu.dot_dimension_numbers<[1], [1], [0], [0], [0, 0, 1, 0], [], []>} : vector<8x8xf32>, vector<16x8xf32>, vector<8x16xf32> -> vector<8x16xf32>
    %cst_9 = arith.constant dense<0xFF800000> : vector<8xf32>
    %18 = vector.multi_reduction <maximumf>, %17, %cst_9 [1] : vector<8x16xf32> to vector<8xf32>
    %19 = vector.shape_cast %18 : vector<8xf32> to vector<8x1xf32>
    %20 = vector.broadcast %19 : vector<8x1xf32> to vector<8x16xf32>
    %21 = arith.cmpf oeq, %17, %20 : vector<8x16xf32>
    %22 = arith.extui %21 : vector<8x16xi1> to vector<8x16xi32>
    %23 = arith.sitofp %22 : vector<8x16xi32> to vector<8x16xf32>
    %cst_10 = arith.constant dense<0.000000e+00> : vector<8xf32>
    %24 = vector.multi_reduction <add>, %23, %cst_10 [1] : vector<8x16xf32> to vector<8xf32>
    %25 = vector.shape_cast %24 : vector<8xf32> to vector<8x1xf32>
    %cst_11 = arith.constant -1.000000e+30 : f32
    %26 = vector.broadcast %cst_11 : f32 to vector<8x16xf32>
    %27 = arith.select %21, %26, %17 : vector<8x16xi1>, vector<8x16xf32>
    %cst_12 = arith.constant 2.000000e+00 : f32
    %cst_13 = arith.constant -1.000000e+30 : f32
    %c0_i32_14 = arith.constant 0 : i32
    %cst_15 = arith.constant dense<0xFF800000> : vector<8xf32>
    %28 = vector.multi_reduction <maximumf>, %27, %cst_15 [1] : vector<8x16xf32> to vector<8xf32>
    %29 = vector.shape_cast %28 : vector<8xf32> to vector<8x1xf32>
    %30 = vector.broadcast %29 : vector<8x1xf32> to vector<8x16xf32>
    %31 = arith.cmpf oeq, %27, %30 : vector<8x16xf32>
    %32 = arith.extui %31 : vector<8x16xi1> to vector<8x16xi32>
    %33 = arith.sitofp %32 : vector<8x16xi32> to vector<8x16xf32>
    %cst_16 = arith.constant dense<0.000000e+00> : vector<8xf32>
    %34 = vector.multi_reduction <add>, %33, %cst_16 [1] : vector<8x16xf32> to vector<8xf32>
    %35 = vector.shape_cast %34 : vector<8xf32> to vector<8x1xf32>
    %36 = vector.broadcast %cst_12 : f32 to vector<8x1xf32>
    %37 = arith.cmpf olt, %25, %36 : vector<8x1xf32>
    %38 = arith.select %37, %29, %19 : vector<8x1xi1>, vector<8x1xf32>
    %39 = arith.addf %25, %35 : vector<8x1xf32>
    %40 = vector.broadcast %cst_13 : f32 to vector<8x16xf32>
    %41 = arith.select %31, %40, %27 : vector<8x16xi1>, vector<8x16xf32>
    %42 = vector.broadcast %38 : vector<8x1xf32> to vector<8x16xf32>
    %43 = arith.cmpf olt, %17, %42 : vector<8x16xf32>
    %cst_17 = arith.constant -1.000000e+30 : f32
    %44 = vector.broadcast %cst_17 : f32 to vector<8x16xf32>
    %45 = arith.select %43, %44, %17 : vector<8x16xi1>, vector<8x16xf32>
    %46 = vector.broadcast %19 : vector<8x1xf32> to vector<8x16xf32>
    %47 = arith.subf %45, %46 : vector<8x16xf32>
    %48 = math.exp %47 : vector<8x16xf32>
    %cst_18 = arith.constant dense<0.000000e+00> : vector<8xf32>
    %49 = vector.multi_reduction <add>, %48, %cst_18 [1] : vector<8x16xf32> to vector<8xf32>
    %50 = vector.shape_cast %49 : vector<8xf32> to vector<8x1xf32>
    %51 = tpu.reciprocal %50 {approx = true} : vector<8x1xf32> -> vector<8x1xf32>
    %52 = vector.broadcast %51 : vector<8x1xf32> to vector<8x16xf32>
    %53 = arith.mulf %48, %52 : vector<8x16xf32>
    %cst_19 = arith.constant dense<0.000000e+00> : vector<8x8xf32>
    %54 = tpu.matmul %53, %16, %cst_19 {dimension_numbers = #tpu.dot_dimension_numbers<[1], [0], [0], [1], [0, 0, 1, 1], [], []>} : vector<8x16xf32>, vector<16x8xf32>, vector<8x8xf32> -> vector<8x8xf32>
    %c0_20 = arith.constant 0 : index
    %c0_21 = arith.constant 0 : index
    %55 = vector.load %arg11[%c0_20, %c0_21] : memref<8x32xf32, #tpu.memory_space<vmem>>, vector<8x8xf32>
    tpu.vector_store %arg11[%c0_20, %c0_21], %54 {strides = array<i32>} : memref<8x32xf32, #tpu.memory_space<vmem>>, vector<8x8xf32>,
    %56 = vector.extract_strided_slice %12 {offsets = [0, 8], sizes = [8, 8], strides = [1, 1]} : vector<8x32xf32> to vector<8x8xf32>
    %57 = vector.extract_strided_slice %13 {offsets = [0, 8], sizes = [16, 8], strides = [1, 1]} : vector<16x64xf32> to vector<16x8xf32>
    %58 = vector.extract_strided_slice %13 {offsets = [0, 40], sizes = [16, 8], strides = [1, 1]} : vector<16x64xf32> to vector<16x8xf32>
    %cst_22 = arith.constant dense<0.000000e+00> : vector<8x16xf32>
    %59 = tpu.matmul %56, %57, %cst_22 {dimension_numbers = #tpu.dot_dimension_numbers<[1], [1], [0], [0], [0, 0, 1, 0], [], []>} : vector<8x8xf32>, vector<16x8xf32>, vector<8x16xf32> -> vector<8x16xf32>
    %cst_23 = arith.constant dense<0xFF800000> : vector<8xf32>
    %60 = vector.multi_reduction <maximumf>, %59, %cst_23 [1] : vector<8x16xf32> to vector<8xf32>
    %61 = vector.shape_cast %60 : vector<8xf32> to vector<8x1xf32>
    %62 = vector.broadcast %61 : vector<8x1xf32> to vector<8x16xf32>
    %63 = arith.cmpf oeq, %59, %62 : vector<8x16xf32>
    %64 = arith.extui %63 : vector<8x16xi1> to vector<8x16xi32>
    %65 = arith.sitofp %64 : vector<8x16xi32> to vector<8x16xf32>
    %cst_24 = arith.constant dense<0.000000e+00> : vector<8xf32>
    %66 = vector.multi_reduction <add>, %65, %cst_24 [1] : vector<8x16xf32> to vector<8xf32>
    %67 = vector.shape_cast %66 : vector<8xf32> to vector<8x1xf32>
    %cst_25 = arith.constant -1.000000e+30 : f32
    %68 = vector.broadcast %cst_25 : f32 to vector<8x16xf32>
    %69 = arith.select %63, %68, %59 : vector<8x16xi1>, vector<8x16xf32>
    %cst_26 = arith.constant 2.000000e+00 : f32
    %cst_27 = arith.constant -1.000000e+30 : f32
    %c0_i32_28 = arith.constant 0 : i32
    %cst_29 = arith.constant dense<0xFF800000> : vector<8xf32>
    %70 = vector.multi_reduction <maximumf>, %69, %cst_29 [1] : vector<8x16xf32> to vector<8xf32>
    %71 = vector.shape_cast %70 : vector<8xf32> to vector<8x1xf32>
    %72 = vector.broadcast %71 : vector<8x1xf32> to vector<8x16xf32>
    %73 = arith.cmpf oeq, %69, %72 : vector<8x16xf32>
    %74 = arith.extui %73 : vector<8x16xi1> to vector<8x16xi32>
    %75 = arith.sitofp %74 : vector<8x16xi32> to vector<8x16xf32>
    %cst_30 = arith.constant dense<0.000000e+00> : vector<8xf32>
    %76 = vector.multi_reduction <add>, %75, %cst_30 [1] : vector<8x16xf32> to vector<8xf32>
    %77 = vector.shape_cast %76 : vector<8xf32> to vector<8x1xf32>
    %78 = vector.broadcast %cst_26 : f32 to vector<8x1xf32>
    %79 = arith.cmpf olt, %67, %78 : vector<8x1xf32>
    %80 = arith.select %79, %71, %61 : vector<8x1xi1>, vector<8x1xf32>
    %81 = arith.addf %67, %77 : vector<8x1xf32>
    %82 = vector.broadcast %cst_27 : f32 to vector<8x16xf32>
    %83 = arith.select %73, %82, %69 : vector<8x16xi1>, vector<8x16xf32>
    %84 = vector.broadcast %80 : vector<8x1xf32> to vector<8x16xf32>
    %85 = arith.cmpf olt, %59, %84 : vector<8x16xf32>
    %cst_31 = arith.constant -1.000000e+30 : f32
    %86 = vector.broadcast %cst_31 : f32 to vector<8x16xf32>
    %87 = arith.select %85, %86, %59 : vector<8x16xi1>, vector<8x16xf32>
    %88 = vector.broadcast %61 : vector<8x1xf32> to vector<8x16xf32>
    %89 = arith.subf %87, %88 : vector<8x16xf32>
    %90 = math.exp %89 : vector<8x16xf32>
    %cst_32 = arith.constant dense<0.000000e+00> : vector<8xf32>
    %91 = vector.multi_reduction <add>, %90, %cst_32 [1] : vector<8x16xf32> to vector<8xf32>
    %92 = vector.shape_cast %91 : vector<8xf32> to vector<8x1xf32>
    %93 = tpu.reciprocal %92 {approx = true} : vector<8x1xf32> -> vector<8x1xf32>
    %94 = vector.broadcast %93 : vector<8x1xf32> to vector<8x16xf32>
    %95 = arith.mulf %90, %94 : vector<8x16xf32>
    %cst_33 = arith.constant dense<0.000000e+00> : vector<8x8xf32>
    %96 = tpu.matmul %95, %58, %cst_33 {dimension_numbers = #tpu.dot_dimension_numbers<[1], [0], [0], [1], [0, 0, 1, 1], [], []>} : vector<8x16xf32>, vector<16x8xf32>, vector<8x8xf32> -> vector<8x8xf32>
    %c0_34 = arith.constant 0 : index
    %c8 = arith.constant 8 : index
    %97 = vector.load %arg11[%c0_34, %c8] : memref<8x32xf32, #tpu.memory_space<vmem>>, vector<8x8xf32>
    tpu.vector_store %arg11[%c0_34, %c8], %96 {strides = array<i32>} : memref<8x32xf32, #tpu.memory_space<vmem>>, vector<8x8xf32>,
    %98 = vector.extract_strided_slice %12 {offsets = [0, 16], sizes = [8, 8], strides = [1, 1]} : vector<8x32xf32> to vector<8x8xf32>
    %99 = vector.extract_strided_slice %13 {offsets = [0, 16], sizes = [16, 8], strides = [1, 1]} : vector<16x64xf32> to vector<16x8xf32>
    %100 = vector.extract_strided_slice %13 {offsets = [0, 48], sizes = [16, 8], strides = [1, 1]} : vector<16x64xf32> to vector<16x8xf32>
    %cst_35 = arith.constant dense<0.000000e+00> : vector<8x16xf32>
    %101 = tpu.matmul %98, %99, %cst_35 {dimension_numbers = #tpu.dot_dimension_numbers<[1], [1], [0], [0], [0, 0, 1, 0], [], []>} : vector<8x8xf32>, vector<16x8xf32>, vector<8x16xf32> -> vector<8x16xf32>
    %cst_36 = arith.constant dense<0xFF800000> : vector<8xf32>
    %102 = vector.multi_reduction <maximumf>, %101, %cst_36 [1] : vector<8x16xf32> to vector<8xf32>
    %103 = vector.shape_cast %102 : vector<8xf32> to vector<8x1xf32>
    %104 = vector.broadcast %103 : vector<8x1xf32> to vector<8x16xf32>
    %105 = arith.cmpf oeq, %101, %104 : vector<8x16xf32>
    %106 = arith.extui %105 : vector<8x16xi1> to vector<8x16xi32>
    %107 = arith.sitofp %106 : vector<8x16xi32> to vector<8x16xf32>
    %cst_37 = arith.constant dense<0.000000e+00> : vector<8xf32>
    %108 = vector.multi_reduction <add>, %107, %cst_37 [1] : vector<8x16xf32> to vector<8xf32>
    %109 = vector.shape_cast %108 : vector<8xf32> to vector<8x1xf32>
    %cst_38 = arith.constant -1.000000e+30 : f32
    %110 = vector.broadcast %cst_38 : f32 to vector<8x16xf32>
    %111 = arith.select %105, %110, %101 : vector<8x16xi1>, vector<8x16xf32>
    %cst_39 = arith.constant 2.000000e+00 : f32
    %cst_40 = arith.constant -1.000000e+30 : f32
    %c0_i32_41 = arith.constant 0 : i32
    %cst_42 = arith.constant dense<0xFF800000> : vector<8xf32>
    %112 = vector.multi_reduction <maximumf>, %111, %cst_42 [1] : vector<8x16xf32> to vector<8xf32>
    %113 = vector.shape_cast %112 : vector<8xf32> to vector<8x1xf32>
    %114 = vector.broadcast %113 : vector<8x1xf32> to vector<8x16xf32>
    %115 = arith.cmpf oeq, %111, %114 : vector<8x16xf32>
    %116 = arith.extui %115 : vector<8x16xi1> to vector<8x16xi32>
    %117 = arith.sitofp %116 : vector<8x16xi32> to vector<8x16xf32>
    %cst_43 = arith.constant dense<0.000000e+00> : vector<8xf32>
    %118 = vector.multi_reduction <add>, %117, %cst_43 [1] : vector<8x16xf32> to vector<8xf32>
    %119 = vector.shape_cast %118 : vector<8xf32> to vector<8x1xf32>
    %120 = vector.broadcast %cst_39 : f32 to vector<8x1xf32>
    %121 = arith.cmpf olt, %109, %120 : vector<8x1xf32>
    %122 = arith.select %121, %113, %103 : vector<8x1xi1>, vector<8x1xf32>
    %123 = arith.addf %109, %119 : vector<8x1xf32>
    %124 = vector.broadcast %cst_40 : f32 to vector<8x16xf32>
    %125 = arith.select %115, %124, %111 : vector<8x16xi1>, vector<8x16xf32>
    %126 = vector.broadcast %122 : vector<8x1xf32> to vector<8x16xf32>
    %127 = arith.cmpf olt, %101, %126 : vector<8x16xf32>
    %cst_44 = arith.constant -1.000000e+30 : f32
    %128 = vector.broadcast %cst_44 : f32 to vector<8x16xf32>
    %129 = arith.select %127, %128, %101 : vector<8x16xi1>, vector<8x16xf32>
    %130 = vector.broadcast %103 : vector<8x1xf32> to vector<8x16xf32>
    %131 = arith.subf %129, %130 : vector<8x16xf32>
    %132 = math.exp %131 : vector<8x16xf32>
    %cst_45 = arith.constant dense<0.000000e+00> : vector<8xf32>
    %133 = vector.multi_reduction <add>, %132, %cst_45 [1] : vector<8x16xf32> to vector<8xf32>
    %134 = vector.shape_cast %133 : vector<8xf32> to vector<8x1xf32>
    %135 = tpu.reciprocal %134 {approx = true} : vector<8x1xf32> -> vector<8x1xf32>
    %136 = vector.broadcast %135 : vector<8x1xf32> to vector<8x16xf32>
    %137 = arith.mulf %132, %136 : vector<8x16xf32>
    %cst_46 = arith.constant dense<0.000000e+00> : vector<8x8xf32>
    %138 = tpu.matmul %137, %100, %cst_46 {dimension_numbers = #tpu.dot_dimension_numbers<[1], [0], [0], [1], [0, 0, 1, 1], [], []>} : vector<8x16xf32>, vector<16x8xf32>, vector<8x8xf32> -> vector<8x8xf32>
    %c0_47 = arith.constant 0 : index
    %c16 = arith.constant 16 : index
    %139 = vector.load %arg11[%c0_47, %c16] : memref<8x32xf32, #tpu.memory_space<vmem>>, vector<8x8xf32>
    tpu.vector_store %arg11[%c0_47, %c16], %138 {strides = array<i32>} : memref<8x32xf32, #tpu.memory_space<vmem>>, vector<8x8xf32>,
    %140 = vector.extract_strided_slice %12 {offsets = [0, 24], sizes = [8, 8], strides = [1, 1]} : vector<8x32xf32> to vector<8x8xf32>
    %141 = vector.extract_strided_slice %13 {offsets = [0, 24], sizes = [16, 8], strides = [1, 1]} : vector<16x64xf32> to vector<16x8xf32>
    %142 = vector.extract_strided_slice %13 {offsets = [0, 56], sizes = [16, 8], strides = [1, 1]} : vector<16x64xf32> to vector<16x8xf32>
    %cst_48 = arith.constant dense<0.000000e+00> : vector<8x16xf32>
    %143 = tpu.matmul %140, %141, %cst_48 {dimension_numbers = #tpu.dot_dimension_numbers<[1], [1], [0], [0], [0, 0, 1, 0], [], []>} : vector<8x8xf32>, vector<16x8xf32>, vector<8x16xf32> -> vector<8x16xf32>
    %cst_49 = arith.constant dense<0xFF800000> : vector<8xf32>
    %144 = vector.multi_reduction <maximumf>, %143, %cst_49 [1] : vector<8x16xf32> to vector<8xf32>
    %145 = vector.shape_cast %144 : vector<8xf32> to vector<8x1xf32>
    %146 = vector.broadcast %145 : vector<8x1xf32> to vector<8x16xf32>
    %147 = arith.cmpf oeq, %143, %146 : vector<8x16xf32>
    %148 = arith.extui %147 : vector<8x16xi1> to vector<8x16xi32>
    %149 = arith.sitofp %148 : vector<8x16xi32> to vector<8x16xf32>
    %cst_50 = arith.constant dense<0.000000e+00> : vector<8xf32>
    %150 = vector.multi_reduction <add>, %149, %cst_50 [1] : vector<8x16xf32> to vector<8xf32>
    %151 = vector.shape_cast %150 : vector<8xf32> to vector<8x1xf32>
    %cst_51 = arith.constant -1.000000e+30 : f32
    %152 = vector.broadcast %cst_51 : f32 to vector<8x16xf32>
    %153 = arith.select %147, %152, %143 : vector<8x16xi1>, vector<8x16xf32>
    %cst_52 = arith.constant 2.000000e+00 : f32
    %cst_53 = arith.constant -1.000000e+30 : f32
    %c0_i32_54 = arith.constant 0 : i32
    %cst_55 = arith.constant dense<0xFF800000> : vector<8xf32>
    %154 = vector.multi_reduction <maximumf>, %153, %cst_55 [1] : vector<8x16xf32> to vector<8xf32>
    %155 = vector.shape_cast %154 : vector<8xf32> to vector<8x1xf32>
    %156 = vector.broadcast %155 : vector<8x1xf32> to vector<8x16xf32>
    %157 = arith.cmpf oeq, %153, %156 : vector<8x16xf32>
    %158 = arith.extui %157 : vector<8x16xi1> to vector<8x16xi32>
    %159 = arith.sitofp %158 : vector<8x16xi32> to vector<8x16xf32>
    %cst_56 = arith.constant dense<0.000000e+00> : vector<8xf32>
    %160 = vector.multi_reduction <add>, %159, %cst_56 [1] : vector<8x16xf32> to vector<8xf32>
    %161 = vector.shape_cast %160 : vector<8xf32> to vector<8x1xf32>
    %162 = vector.broadcast %cst_52 : f32 to vector<8x1xf32>
    %163 = arith.cmpf olt, %151, %162 : vector<8x1xf32>
    %164 = arith.select %163, %155, %145 : vector<8x1xi1>, vector<8x1xf32>
    %165 = arith.addf %151, %161 : vector<8x1xf32>
    %166 = vector.broadcast %cst_53 : f32 to vector<8x16xf32>
    %167 = arith.select %157, %166, %153 : vector<8x16xi1>, vector<8x16xf32>
    %168 = vector.broadcast %164 : vector<8x1xf32> to vector<8x16xf32>
    %169 = arith.cmpf olt, %143, %168 : vector<8x16xf32>
    %cst_57 = arith.constant -1.000000e+30 : f32
    %170 = vector.broadcast %cst_57 : f32 to vector<8x16xf32>
    %171 = arith.select %169, %170, %143 : vector<8x16xi1>, vector<8x16xf32>
    %172 = vector.broadcast %145 : vector<8x1xf32> to vector<8x16xf32>
    %173 = arith.subf %171, %172 : vector<8x16xf32>
    %174 = math.exp %173 : vector<8x16xf32>
    %cst_58 = arith.constant dense<0.000000e+00> : vector<8xf32>
    %175 = vector.multi_reduction <add>, %174, %cst_58 [1] : vector<8x16xf32> to vector<8xf32>
    %176 = vector.shape_cast %175 : vector<8xf32> to vector<8x1xf32>
    %177 = tpu.reciprocal %176 {approx = true} : vector<8x1xf32> -> vector<8x1xf32>
    %178 = vector.broadcast %177 : vector<8x1xf32> to vector<8x16xf32>
    %179 = arith.mulf %174, %178 : vector<8x16xf32>
    %cst_59 = arith.constant dense<0.000000e+00> : vector<8x8xf32>
    %180 = tpu.matmul %179, %142, %cst_59 {dimension_numbers = #tpu.dot_dimension_numbers<[1], [0], [0], [1], [0, 0, 1, 1], [], []>} : vector<8x16xf32>, vector<16x8xf32>, vector<8x8xf32> -> vector<8x8xf32>
    %c0_60 = arith.constant 0 : index
    %c24 = arith.constant 24 : index
    %181 = vector.load %arg11[%c0_60, %c24] : memref<8x32xf32, #tpu.memory_space<vmem>>, vector<8x8xf32>
    tpu.vector_store %arg11[%c0_60, %c24], %180 {strides = array<i32>} : memref<8x32xf32, #tpu.memory_space<vmem>>, vector<8x8xf32>,
    %c0_61 = arith.constant 0 : index
    %c0_62 = arith.constant 0 : index
    %182 = vector.load %arg11[%c0_61, %c0_62] : memref<8x32xf32, #tpu.memory_space<vmem>>, vector<8x32xf32>
    %c0_63 = arith.constant 0 : index
    %c0_64 = arith.constant 0 : index
    %183 = vector.load %arg7[%c0_63, %c0_64] : memref<32x32xf32, #tpu.memory_space<vmem>>, vector<32x32xf32>
    %cst_65 = arith.constant dense<0.000000e+00> : vector<8x32xf32>
    %184 = tpu.matmul %182, %183, %cst_65 {dimension_numbers = #tpu.dot_dimension_numbers<[1], [0], [0], [1], [0, 0, 1, 1], [], []>} : vector<8x32xf32>, vector<32x32xf32>, vector<8x32xf32> -> vector<8x32xf32>
    %c0_66 = arith.constant 0 : index
    %c0_67 = arith.constant 0 : index
    %185 = vector.load %arg8[%c0_66, %c0_67] : memref<1x32xf32, #tpu.memory_space<vmem>>, vector<1x32xf32>
    %186 = vector.broadcast %185 : vector<1x32xf32> to vector<8x32xf32>
    %187 = arith.addf %184, %186 : vector<8x32xf32>
    %c0_68 = arith.constant 0 : index
    %c0_69 = arith.constant 0 : index
    %c0_70 = arith.constant 0 : index
    %188 = vector.load %arg9[%c0_68, %c0_69, %c0_70] : memref<1x8x32xf32, #tpu.memory_space<vmem>>, vector<1x8x32xf32>
    %189 = vector.shape_cast %188 : vector<1x8x32xf32> to vector<8x32xf32>
    %190 = vector.shape_cast %187 : vector<8x32xf32> to vector<1x8x32xf32>
    tpu.vector_store %arg9[%c0_68, %c0_69, %c0_70], %190 {strides = array<i32>} : memref<1x8x32xf32, #tpu.memory_space<vmem>>, vector<1x8x32xf32>,
    return
  }
  func.func @transform_0(%arg0: i32, %arg1: i32) -> (i32, i32, i32) {
    %c0_i32 = arith.constant 0 : i32
    %c0_i32_0 = arith.constant 0 : i32
    %c0_i32_1 = arith.constant 0 : i32
    return %arg0, %c0_i32, %c0_i32_0 : i32, i32, i32
  }
  func.func @transform_1(%arg0: i32, %arg1: i32) -> (i32, i32) {
    %c0_i32 = arith.constant 0 : i32
    %c0_i32_0 = arith.constant 0 : i32
    %c0_i32_1 = arith.constant 0 : i32
    return %c0_i32, %c0_i32_0 : i32, i32
  }
  func.func @transform_2(%arg0: i32, %arg1: i32) -> (i32, i32) {
    %c0_i32 = arith.constant 0 : i32
    %c0_i32_0 = arith.constant 0 : i32
    %c0_i32_1 = arith.constant 0 : i32
    return %c0_i32, %c0_i32_0 : i32, i32
  }
  func.func @transform_3(%arg0: i32, %arg1: i32) -> (i32, i32) {
    %c0_i32 = arith.constant 0 : i32
    %c0_i32_0 = arith.constant 0 : i32
    %c0_i32_1 = arith.constant 0 : i32
    return %c0_i32, %c0_i32_0 : i32, i32
  }
  func.func @transform_4(%arg0: i32, %arg1: i32) -> (i32, i32) {
    %c0_i32 = arith.constant 0 : i32
    %c0_i32_0 = arith.constant 0 : i32
    %c0_i32_1 = arith.constant 0 : i32
    return %c0_i32, %c0_i32_0 : i32, i32
  }
  func.func @transform_5(%arg0: i32, %arg1: i32) -> (i32, i32) {
    %c0_i32 = arith.constant 0 : i32
    %c0_i32_0 = arith.constant 0 : i32
    %c0_i32_1 = arith.constant 0 : i32
    return %c0_i32, %c0_i32_0 : i32, i32
  }
  func.func @transform_6(%arg0: i32, %arg1: i32) -> (i32, i32) {
    %c0_i32 = arith.constant 0 : i32
    %c0_i32_0 = arith.constant 0 : i32
    %c0_i32_1 = arith.constant 0 : i32
    return %c0_i32, %c0_i32_0 : i32, i32
  }
  func.func @transform_7(%arg0: i32, %arg1: i32) -> (i32, i32, i32) {
    %c0_i32 = arith.constant 0 : i32
    %c0_i32_0 = arith.constant 0 : i32
    return %arg0, %arg1, %c0_i32 : i32, i32, i32
  }
}

</mosaic_0001>

<llo_original>
// kernel: tpu_custom_call.1
$region0: #{tpu_custom_call.1}
  #allocation0 [shape = 'u32[]', space=smem, size = 0x4, offset = 0x4, fixed_abs, tag = 'smem constant byte address 0x4 - core index']
  #allocation1 [shape = 'u32[72,128]{1,0:T(1,128)}', space=vmem, size = 0x9000, scoped, tag = 'internal scratch']
  #allocation2 [shape = 'f32[16,64]{1,0:T(8,128)}', space=vmem, size = 0x2000, scoped, tag = 'scratch operand']
  #allocation3 [shape = 'f32[8,32]{1,0:T(8,128)}', space=vmem, size = 0x1000, scoped, tag = 'scratch operand']
  %s0 = inlined_call_operand.hbm [shape: f32[2,16,32], index: 0, kind: input, shape index: {}]
  %s1 = inlined_call_operand.hbm [shape: f32[32,32], index: 1, kind: input, shape index: {}]
  %s2 = inlined_call_operand.vmem [shape: f32[1,32], index: 2, kind: input, shape index: {}]
  %s3 = inlined_call_operand.hbm [shape: f32[32,64], index: 3, kind: input, shape index: {}]
  %s4 = inlined_call_operand.vmem [shape: f32[1,64], index: 4, kind: input, shape index: {}]
  %s5 = inlined_call_operand.hbm [shape: f32[32,32], index: 5, kind: input, shape index: {}]
  %s6 = inlined_call_operand.vmem [shape: f32[1,32], index: 6, kind: input, shape index: {}]
  %s7 = inlined_call_operand.hbm [shape: f32[2,16,32], index: 7, kind: output, shape index: {}]
  %s8 = sld [smem:[#allocation0]]
  $region81: #{tpu_custom_call.1} parent=0
    _
  %s10 = ssub.s32 1, %s8
  %s11 = scalar_select 0, %s10, %s8
  $region1: #{tpu_custom_call.1} parent=0
    #allocation4 [shape = 'u8[16384]{0}', space=vmem, size = 0x4000, scoped, tag = 'input window, operand 0']
    #allocation5 [shape = 's32[2]{0}', space=sflag, size = 0x8, scoped, tag = 'scoped memory for tpu_custom_call.1']
    #allocation6 [shape = 's32[2]{0}', space=sflag, size = 0x8, scoped, tag = 'scoped memory for tpu_custom_call.1']
    #allocation7 [shape = 'u8[16384]{0}', space=vmem, size = 0x4000, scoped, tag = 'input window, operand 1, single buffered']
    #allocation8 [shape = 's32[1]{0}', space=sflag, size = 0x4, scoped, tag = 'scoped memory for tpu_custom_call.1']
    #allocation9 [shape = 'u8[16384]{0}', space=vmem, size = 0x4000, scoped, tag = 'input window, operand 3, single buffered']
    #allocation10 [shape = 'u8[16384]{0}', space=vmem, size = 0x4000, scoped, tag = 'input window, operand 5, single buffered']
    #allocation11 [shape = 's32[1]{0}', space=sflag, size = 0x4, scoped, tag = 'scoped memory for tpu_custom_call.1']
    #allocation12 [shape = 'u8[8192]{0}', space=vmem, size = 0x2000, scoped, tag = 'output window, operand 0']
    %12 = vsyncpa [#allocation5], 0
    %s13 = scalar_lea.sflag [#allocation5], 1
    %14 = vsyncpa %s13, 0
    %15 = vsyncpa [#allocation8], 0
    %16 = vsyncpa [#allocation11], 0
    %17 = vsyncpa [#allocation6], 0
    %s18 = scalar_lea.sflag [#allocation6], 1
    %19 = vsyncpa %s18, 0
    loop: start=0, step=1, limit=6
    $region2: #{tpu_custom_call.1} parent=1 // loop_pre_header
      _
    $region3: #{tpu_custom_call.1} parent=1 // loop_header
      %s21 = sphi 0, %s25
      %p22 = scmp.ge.s32.totalorder %s21, 6
      %s28 = sphi 0, %s40
      %s29 = sphi 0, %s36
      %s30 = sphi 0, %s28
      %s31 = sphi 0, %s29
      %s32 = sphi 0, %s30
      %s33 = sphi 0, %s31
      %s43 = sphi 0, %s45
      %s46 = sphi 0, %s43
      %s47 = sphi 0, %s46
      %s63 = sphi 0, %s47
      %s67 = sphi 0, %s67
      %s69 = sphi 0, %s67
      %s70 = sphi 0, %s69
      %s84 = sphi 0, %s70
      %s88 = sphi 0, %s88
      %s90 = sphi 0, %s88
      %s91 = sphi 0, %s90
      %s105 = sphi 0, %s91
      %s109 = sphi 0, %s109
      %s111 = sphi 0, %s109
      %s112 = sphi 0, %s111
      %s126 = sphi 0, %s112
      %s130 = sphi 0, %s130
      %s132 = sphi 0, %s130
      %s133 = sphi 0, %s132
      %s147 = sphi 0, %s133
      %s151 = sphi 0, %s151
      %s153 = sphi 0, %s151
      %s154 = sphi 0, %s153
      %s168 = sphi 0, %s154
      %s172 = sphi 0, %s172
      %s174 = sphi 0, %s172
      %s175 = sphi 0, %s174
      %s189 = sphi 0, %s175
      %s197 = sphi 0, %s199
      %s200 = sphi 0, %s197
      %s201 = sphi 0, %s200
      %s217 = sphi 0, %s201
    $region4: #{tpu_custom_call.1} parent=1 // loop_header_branch
      %24 = sbr.rel (%p22) target = $region8
    $region5: #{tpu_custom_call.1} parent=1 // loop_body
      %s26 = ssub.s32 %s21, 1
      %s27 = ssub.s32 %s21, 2
      %s34 = sadd.s32 1, %s29
      %p35 = scmp.ge.s32.totalorder %s34, 2
      %s36 = scalar_select %p35, 0, %s34
      %s37 = sadd.s32 1, %s28
      %s38 = scalar_select %p35, %s37, %s28
      %p39 = scmp.ge.s32.totalorder %s38, 2
      %s40 = scalar_select %p39, 0, %s38
      %s41 = ssub.s32 %s28, %s40
      %p42 = scmp.eq.s32.totalorder %s41, 0
      %s44 = sadd.s32 %s43, 1
      %s45 = scalar_select %p42, %s43, %s44
      %p48 = pneg %p42
      %p49 = scmp.eq.s32.totalorder %s21, 3
      %p50 = por %p48, %p49
      %p51 = scmp.ne.s32.totalorder %s43, %s46
      %p52 = scmp.eq.s32.totalorder %s21, 0
      %p53 = por %p51, %p52
      %p54 = scmp.ne.s32.totalorder %s43, %s46
      %p55 = scmp.eq.s32.totalorder %s26, 3
      %p56 = por %p54, %p55
      %p57 = scmp.ne.s32.totalorder %s46, %s47
      %p58 = scmp.eq.s32.totalorder %s26, 0
      %p59 = por %p57, %p58
      %p60 = scmp.ne.s32.totalorder %s46, %s47
      %p61 = scmp.eq.s32.totalorder %s27, 3
      %p62 = por %p60, %p61
      %p64 = scmp.ne.s32.totalorder %s47, %s63
      %p65 = scmp.eq.s32.totalorder %s27, 0
      %p66 = por %p64, %p65
      %s68 = sadd.s32 %s67, 1
      %p71 = scmp.eq.s32.totalorder %s21, 3
      %p72 = scmp.ne.s32.totalorder %s67, %s69
      %p73 = scmp.eq.s32.totalorder %s21, 0
      %p74 = por %p72, %p73
      %p75 = scmp.ne.s32.totalorder %s67, %s69
      %p76 = scmp.eq.s32.totalorder %s26, 3
      %p77 = por %p75, %p76
      %p78 = scmp.ne.s32.totalorder %s69, %s70
      %p79 = scmp.eq.s32.totalorder %s26, 0
      %p80 = por %p78, %p79
      %p81 = scmp.ne.s32.totalorder %s69, %s70
      %p82 = scmp.eq.s32.totalorder %s27, 3
      %p83 = por %p81, %p82
      %p85 = scmp.ne.s32.totalorder %s70, %s84
      %p86 = scmp.eq.s32.totalorder %s27, 0
      %p87 = por %p85, %p86
      %s89 = sadd.s32 %s88, 1
      %p92 = scmp.eq.s32.totalorder %s21, 3
      %p93 = scmp.ne.s32.totalorder %s88, %s90
      %p94 = scmp.eq.s32.totalorder %s21, 0
      %p95 = por %p93, %p94
      %p96 = scmp.ne.s32.totalorder %s88, %s90
      %p97 = scmp.eq.s32.totalorder %s26, 3
      %p98 = por %p96, %p97
      %p99 = scmp.ne.s32.totalorder %s90, %s91
      %p100 = scmp.eq.s32.totalorder %s26, 0
      %p101 = por %p99, %p100
      %p102 = scmp.ne.s32.totalorder %s90, %s91
      %p103 = scmp.eq.s32.totalorder %s27, 3
      %p104 = por %p102, %p103
      %p106 = scmp.ne.s32.totalorder %s91, %s105
      %p107 = scmp.eq.s32.totalorder %s27, 0
      %p108 = por %p106, %p107
      %s110 = sadd.s32 %s109, 1
      %p113 = scmp.eq.s32.totalorder %s21, 3
      %p114 = scmp.ne.s32.totalorder %s109, %s111
      %p115 = scmp.eq.s32.totalorder %s21, 0
      %p116 = por %p114, %p115
      %p117 = scmp.ne.s32.totalorder %s109, %s111
      %p118 = scmp.eq.s32.totalorder %s26, 3
      %p119 = por %p117, %p118
      %p120 = scmp.ne.s32.totalorder %s111, %s112
      %p121 = scmp.eq.s32.totalorder %s26, 0
      %p122 = por %p120, %p121
      %p123 = scmp.ne.s32.totalorder %s111, %s112
      %p124 = scmp.eq.s32.totalorder %s27, 3
      %p125 = por %p123, %p124
      %p127 = scmp.ne.s32.totalorder %s112, %s126
      %p128 = scmp.eq.s32.totalorder %s27, 0
      %p129 = por %p127, %p128
      %s131 = sadd.s32 %s130, 1
      %p134 = scmp.eq.s32.totalorder %s21, 3
      %p135 = scmp.ne.s32.totalorder %s130, %s132
      %p136 = scmp.eq.s32.totalorder %s21, 0
      %p137 = por %p135, %p136
      %p138 = scmp.ne.s32.totalorder %s130, %s132
      %p139 = scmp.eq.s32.totalorder %s26, 3
      %p140 = por %p138, %p139
      %p141 = scmp.ne.s32.totalorder %s132, %s133
      %p142 = scmp.eq.s32.totalorder %s26, 0
      %p143 = por %p141, %p142
      %p144 = scmp.ne.s32.totalorder %s132, %s133
      %p145 = scmp.eq.s32.totalorder %s27, 3
      %p146 = por %p144, %p145
      %p148 = scmp.ne.s32.totalorder %s133, %s147
      %p149 = scmp.eq.s32.totalorder %s27, 0
      %p150 = por %p148, %p149
      %s152 = sadd.s32 %s151, 1
      %p155 = scmp.eq.s32.totalorder %s21, 3
      %p156 = scmp.ne.s32.totalorder %s151, %s153
      %p157 = scmp.eq.s32.totalorder %s21, 0
      %p158 = por %p156, %p157
      %p159 = scmp.ne.s32.totalorder %s151, %s153
      %p160 = scmp.eq.s32.totalorder %s26, 3
      %p161 = por %p159, %p160
      %p162 = scmp.ne.s32.totalorder %s153, %s154
      %p163 = scmp.eq.s32.totalorder %s26, 0
      %p164 = por %p162, %p163
      %p165 = scmp.ne.s32.totalorder %s153, %s154
      %p166 = scmp.eq.s32.totalorder %s27, 3
      %p167 = por %p165, %p166
      %p169 = scmp.ne.s32.totalorder %s154, %s168
      %p170 = scmp.eq.s32.totalorder %s27, 0
      %p171 = por %p169, %p170
      %s173 = sadd.s32 %s172, 1
      %p176 = scmp.eq.s32.totalorder %s21, 3
      %p177 = scmp.ne.s32.totalorder %s172, %s174
      %p178 = scmp.eq.s32.totalorder %s21, 0
      %p179 = por %p177, %p178
      %p180 = scmp.ne.s32.totalorder %s172, %s174
      %p181 = scmp.eq.s32.totalorder %s26, 3
      %p182 = por %p180, %p181
      %p183 = scmp.ne.s32.totalorder %s174, %s175
      %p184 = scmp.eq.s32.totalorder %s26, 0
      %p185 = por %p183, %p184
      %p186 = scmp.ne.s32.totalorder %s174, %s175
      %p187 = scmp.eq.s32.totalorder %s27, 3
      %p188 = por %p186, %p187
      %p190 = scmp.ne.s32.totalorder %s175, %s189
      %p191 = scmp.eq.s32.totalorder %s27, 0
      %p192 = por %p190, %p191
      %s193 = ssub.s32 %s28, %s40
      %s194 = ssub.s32 %s29, %s36
      %s195 = sor.u32 %s193, %s194
      %p196 = scmp.eq.s32.totalorder %s195, 0
      %s198 = sadd.s32 %s197, 1
      %s199 = scalar_select %p196, %s197, %s198
      %p202 = pneg %p196
      %p203 = scmp.eq.s32.totalorder %s21, 3
      %p204 = por %p202, %p203
      %p205 = scmp.ne.s32.totalorder %s197, %s200
      %p206 = scmp.eq.s32.totalorder %s21, 0
      %p207 = por %p205, %p206
      %p208 = scmp.ne.s32.totalorder %s197, %s200
      %p209 = scmp.eq.s32.totalorder %s26, 3
      %p210 = por %p208, %p209
      %p211 = scmp.ne.s32.totalorder %s200, %s201
      %p212 = scmp.eq.s32.totalorder %s26, 0
      %p213 = por %p211, %p212
      %p214 = scmp.ne.s32.totalorder %s200, %s201
      %p215 = scmp.eq.s32.totalorder %s27, 3
      %p216 = por %p214, %p215
      %p218 = scmp.ne.s32.totalorder %s201, %s217
      %p219 = scmp.eq.s32.totalorder %s27, 0
      %p220 = por %p218, %p219
      %p221 = scmp.le.s32.totalorder 1, %s21
      %p222 = scmp.lt.s32.totalorder %s21, 5
      %p223 = pnand %p221, %p222
      %p224 = pneg %p223
      // Predicated region
      $region9: #{tpu_custom_call.1} parent=5 // pred_check
        _
      $region10: #{tpu_custom_call.1} parent=5 // pred_check_branch
        %226 = sbr.rel (%p223) target = $region12
      $region11: #{tpu_custom_call.1} parent=5 // pred_region
        %s227 = ssub.s32 %s21, 1
        // Predicated region
        $region13: #{tpu_custom_call.1} parent=11 // pred_check
          %p228 = pneg %p80
        $region14: #{tpu_custom_call.1} parent=11 // pred_check_branch
          %230 = sbr.rel (%p228) target = $region16
        $region15: #{tpu_custom_call.1} parent=11 // pred_region
          %232 = vsyncadd [#allocation8], 0
          %s233 = sshll.u32 %s1, 4
          %s234 = int_to_ptr.hbm [resolvable:$true] %s233
          %s235 = sshll.u32 [#allocation7], 4
          %s236 = int_to_ptr.vmem [resolvable:$true] %s235
          %241 = dma.hbm_to_vmem [thread:$0]  %s234, 512, %s236, [#allocation8], 128, 128, 8
        $region16: #{tpu_custom_call.1} parent=11 // pred_fallthru
          _
        // Predicated region
        $region17: #{tpu_custom_call.1} parent=11 // pred_check
          %p242 = pneg %p101
        $region18: #{tpu_custom_call.1} parent=11 // pred_check_branch
          %244 = sbr.rel (%p242) target = $region20
        $region19: #{tpu_custom_call.1} parent=11 // pred_region
          _
        $region20: #{tpu_custom_call.1} parent=11 // pred_fallthru
          _
        // Predicated region
        $region21: #{tpu_custom_call.1} parent=11 // pred_check
          %p245 = pneg %p122
        $region22: #{tpu_custom_call.1} parent=11 // pred_check_branch
          %247 = sbr.rel (%p245) target = $region24
        $region23: #{tpu_custom_call.1} parent=11 // pred_region
          %249 = vsyncadd [#allocation8], 0
          %s250 = sshll.u32 %s3, 4
          %s251 = int_to_ptr.hbm [resolvable:$true] %s250
          %s252 = sshll.u32 [#allocation9], 4
          %s253 = int_to_ptr.vmem [resolvable:$true] %s252
          %258 = dma.hbm_to_vmem [thread:$0]  %s251, 512, %s253, [#allocation8], 128, 128, 8
        $region24: #{tpu_custom_call.1} parent=11 // pred_fallthru
          _
        // Predicated region
        $region25: #{tpu_custom_call.1} parent=11 // pred_check
          %p259 = pneg %p143
        $region26: #{tpu_custom_call.1} parent=11 // pred_check_branch
          %261 = sbr.rel (%p259) target = $region28
        $region27: #{tpu_custom_call.1} parent=11 // pred_region
          _
        $region28: #{tpu_custom_call.1} parent=11 // pred_fallthru
          _
        // Predicated region
        $region29: #{tpu_custom_call.1} parent=11 // pred_check
          %p262 = pneg %p164
        $region30: #{tpu_custom_call.1} parent=11 // pred_check_branch
          %264 = sbr.rel (%p262) target = $region32
        $region31: #{tpu_custom_call.1} parent=11 // pred_region
          %266 = vsyncadd [#allocation11], 0
          %s267 = sshll.u32 %s5, 4
          %s268 = int_to_ptr.hbm [resolvable:$true] %s267
          %s269 = sshll.u32 [#allocation10], 4
          %s270 = int_to_ptr.vmem [resolvable:$true] %s269
          %275 = dma.hbm_to_vmem [thread:$0]  %s268, 512, %s270, [#allocation11], 128, 128, 8
        $region32: #{tpu_custom_call.1} parent=11 // pred_fallthru
          _
        // Predicated region
        $region33: #{tpu_custom_call.1} parent=11 // pred_check
          %p276 = pneg %p185
        $region34: #{tpu_custom_call.1} parent=11 // pred_check_branch
          %278 = sbr.rel (%p276) target = $region36
        $region35: #{tpu_custom_call.1} parent=11 // pred_region
          _
        $region36: #{tpu_custom_call.1} parent=11 // pred_fallthru
          _
      $region12: #{tpu_custom_call.1} parent=5 // pred_fallthru
        _
      %p279 = scmp.lt.s32.totalorder %s21, 4
      // Predicated region
      $region37: #{tpu_custom_call.1} parent=5 // pred_check
        %p280 = pneg %p279
      $region38: #{tpu_custom_call.1} parent=5 // pred_check_branch
        %282 = sbr.rel (%p280) target = $region40
      $region39: #{tpu_custom_call.1} parent=5 // pred_region
        // Predicated region
        $region41: #{tpu_custom_call.1} parent=39 // pred_check
          %p283 = pneg %p53
        $region42: #{tpu_custom_call.1} parent=39 // pred_check_branch
          %285 = sbr.rel (%p283) target = $region44
        $region43: #{tpu_custom_call.1} parent=39 // pred_region
          %s286 = sand.u32 %s43, 1
          %s287 = scalar_lea.sflag [#allocation5], %s286
          %s288 = sand.u32 %s43, 1
          %s289 = smul.addr %s288, 16
          %s290 = scalar_lea.vmem [#allocation4], %s289
          %292 = vsyncadd %s287, 0
          %s293 = smul.addr %s28, 2
          %s294 = smul.addr %s293, 8
          %s295 = scalar_lea.hbm %s0, %s294
          %s296 = sshll.u32 %s295, 4
          %s297 = int_to_ptr.hbm [resolvable:$true] %s296
          %s298 = sshll.u32 %s290, 4
          %s299 = int_to_ptr.vmem [resolvable:$true] %s298
          %304 = dma.hbm_to_vmem [thread:$0]  %s297, 256, %s299, %s287, 128, 128, 8
        $region44: #{tpu_custom_call.1} parent=39 // pred_fallthru
          _
      $region40: #{tpu_custom_call.1} parent=5 // pred_fallthru
        _
      %p305 = scmp.le.s32.totalorder 1, %s21
      %p306 = scmp.lt.s32.totalorder %s21, 5
      %p307 = pnand %p305, %p306
      %p308 = pneg %p307
      // Predicated region
      $region45: #{tpu_custom_call.1} parent=5 // pred_check
        _
      $region46: #{tpu_custom_call.1} parent=5 // pred_check_branch
        %310 = sbr.rel (%p307) target = $region48
      $region47: #{tpu_custom_call.1} parent=5 // pred_region
        %s311 = ssub.s32 %s21, 1
        %s312 = sand.u32 %s46, 1
        %s313 = scalar_lea.sflag [#allocation5], %s312
        %s314 = sand.u32 %s46, 1
        %s315 = smul.addr %s314, 16
        %s316 = scalar_lea.vmem [#allocation4], %s315
        // Predicated region
        $region49: #{tpu_custom_call.1} parent=47 // pred_check
          %p317 = pneg %p59
        $region50: #{tpu_custom_call.1} parent=47 // pred_check_branch
          %319 = sbr.rel (%p317) target = $region52
        $region51: #{tpu_custom_call.1} parent=47 // pred_region
          %321 = dma.done %s313, 256
        $region52: #{tpu_custom_call.1} parent=47 // pred_fallthru
          _
        // Predicated region
        $region53: #{tpu_custom_call.1} parent=47 // pred_check
          %p322 = pneg %p80
        $region54: #{tpu_custom_call.1} parent=47 // pred_check_branch
          %324 = sbr.rel (%p322) target = $region56
        $region55: #{tpu_custom_call.1} parent=47 // pred_region
          %326 = dma.done [#allocation8], 512
        $region56: #{tpu_custom_call.1} parent=47 // pred_fallthru
          _
        // Predicated region
        $region57: #{tpu_custom_call.1} parent=47 // pred_check
          %p327 = pneg %p122
        $region58: #{tpu_custom_call.1} parent=47 // pred_check_branch
          %329 = sbr.rel (%p327) target = $region60
        $region59: #{tpu_custom_call.1} parent=47 // pred_region
          %331 = dma.done [#allocation8], 512
        $region60: #{tpu_custom_call.1} parent=47 // pred_fallthru
          _
        // Predicated region
        $region61: #{tpu_custom_call.1} parent=47 // pred_check
          %p332 = pneg %p164
        $region62: #{tpu_custom_call.1} parent=47 // pred_check_branch
          %334 = sbr.rel (%p332) target = $region64
        $region63: #{tpu_custom_call.1} parent=47 // pred_region
          %336 = dma.done [#allocation11], 512
        $region64: #{tpu_custom_call.1} parent=47 // pred_fallthru
          _
        %s337 = sand.u32 %s46, 1
        %s338 = scalar_lea.sflag [#allocation5], %s337
        %s339 = sand.u32 %s46, 1
        %s340 = smul.addr %s339, 16
        %s341 = scalar_lea.vmem [#allocation4], %s340
        %p342 = pneg %p59
        %p343 = pneg %p56
        %p344 = pneg %p80
        %p345 = pneg %p77
        %p346 = pneg %p101
        %p347 = pneg %p98
        %p348 = pneg %p122
        %p349 = pneg %p119
        %p350 = pneg %p143
        %p351 = pneg %p140
        %p352 = pneg %p164
        %p353 = pneg %p161
        %p354 = pneg %p185
        %p355 = pneg %p182
        %p356 = pneg %p213
        %p357 = pneg %p210
        %s358 = sand.u32 %s200, 1
        %s359 = scalar_lea.sflag [#allocation6], %s358
        %s360 = sand.u32 %s200, 1
        %s361 = smul.addr %s360, 8
        %s362 = scalar_lea.vmem [#allocation12], %s361
        %p363 = scmp.eq.s32.totalorder %s31, 0
        // Predicated region
        $region65: #{tpu_custom_call.1} parent=47 // pred_check
          %p364 = pneg %p363
        $region66: #{tpu_custom_call.1} parent=47 // pred_check_branch
          %366 = sbr.rel (%p364) target = $region68
        $region67: #{tpu_custom_call.1} parent=47 // pred_region
          %v367 = vld [vmem:[%s316] sm:$0xff]
          %v368 = vld [vmem:[%s316 + $0x8] sm:$0xff]
          %v369 = vld [vmem:[#allocation9] sm:$0xff]
          %v370 = vld [vmem:[#allocation9 + $0x8] sm:$0xff]
          %v371 = vld [vmem:[#allocation9 + $0x10] sm:$0xff]
          %v372 = vld [vmem:[#allocation9 + $0x18] sm:$0xff]
          %v373 = vld [vmem:[%s4] sm:$0x1]
          %v375 = vperm.slane %v373, 0
          %vm377 = vcmask 261120
          %v379 = vsel %vm377, %v367, 0
          %v382 = vsel %vm377, %v368, 0
          %384 = vmatpush.msra.mxu0 0.0
          %385 = vmatpush.msra.mxu0 0.0
          %386 = vmatpush.msra.mxu0 0.0
          %387 = vmatpush.msra.mxu0 0.0
          %388 = vmatpush.msra.mxu0 0.0
          %389 = vmatpush.msra.mxu0 0.0
          %390 = vmatpush.msra.mxu0 0.0
          %391 = vmatpush.msra.mxu0 0.0
          %392 = vmatpush.msra.mxu0 0.0
          %393 = vmatpush.msra.mxu0 0.0
          %394 = vmatpush.msra.mxu0 0.0
          %395 = vmatpush.msra.mxu0 0.0
          %396 = vmatpush.msra.mxu0 %v372
          %397 = vmatpush.msra.mxu0 %v371
          %398 = vmatpush.msra.mxu0 %v370
          %399 = vmatpush.msra.mxu0 %v369
          %400 = vmatmul.f32.gmra.mxu0 %v379
          %v401 = vpop.f32.mrf.mxu0
          %v402 = vadd.f32 %v375, %v401
          %403 = vmatmul.f32.gmra.mxu0 %v382
          %v404 = vpop.f32.mrf.mxu0
          %v405 = vadd.f32 %v375, %v404
          %406 = vdwg.mxu0
          %vm407 = vcmask 523264
          %408 = vst.msk [vmem:[#allocation2] sm:$0xff] %vm407, %v402
          %409 = vst.msk [vmem:[#allocation2 + $0x8] sm:$0xff] %vm407, %v405
        $region68: #{tpu_custom_call.1} parent=47 // pred_fallthru
          _
        %s410 = smul.u32 %s31, 8
        %s411 = scalar_lea.vmem %s316, %s410 [#allocation4]
        %v412 = vld [vmem:[%s411] sm:$0xff]
        %v413 = vld [vmem:[#allocation7] sm:$0xff]
        %v414 = vld [vmem:[#allocation7 + $0x8] sm:$0xff]
        %v415 = vld [vmem:[#allocation7 + $0x10] sm:$0xff]
        %v416 = vld [vmem:[#allocation7 + $0x18] sm:$0xff]
        %v417 = vld [vmem:[%s2] sm:$0x1]
        %v419 = vperm.slane %v417, 0
        %vm421 = vcmask 261120
        %v423 = vsel %vm421, %v412, 0
        %425 = vmatpush.msra.mxu0 0.0
        %426 = vmatpush.msra.mxu0 0.0
        %427 = vmatpush.msra.mxu0 0.0
        %428 = vmatpush.msra.mxu0 0.0
        %429 = vmatpush.msra.mxu0 0.0
        %430 = vmatpush.msra.mxu0 0.0
        %431 = vmatpush.msra.mxu0 0.0
        %432 = vmatpush.msra.mxu0 0.0
        %433 = vmatpush.msra.mxu0 0.0
        %434 = vmatpush.msra.mxu0 0.0
        %435 = vmatpush.msra.mxu0 0.0
        %436 = vmatpush.msra.mxu0 0.0
        %437 = vmatpush.msra.mxu0 %v416
        %438 = vmatpush.msra.mxu0 %v415
        %439 = vmatpush.msra.mxu0 %v414
        %440 = vmatpush.msra.mxu0 %v413
        %441 = vmatmul.f32.gmra.mxu0 %v423
        %v442 = vpop.f32.mrf.mxu0
        %v443 = vadd.f32 %v419, %v442
        %444 = vdwg.mxu0
        %v445 = vld [vmem:[#allocation2] sm:$0xff]
        %v446 = vld [vmem:[#allocation2 + $0x8] sm:$0xff]
        %vm447 = vcmask 64512
        %v449 = vsel %vm447, %v443, 0
        %v452 = vsel %vm447, %v445, 0
        %v455 = vsel %vm447, %v446, 0
        %457 = vmatpush.xpose.msra.mxu0 0.0
        %458 = vmatpush.xpose.msra.mxu0 0.0
        %459 = vmatpush.xpose.msra.mxu0 0.0
        %460 = vmatpush.xpose.msra.mxu0 0.0
        %461 = vmatpush.xpose.msra.mxu0 0.0
        %462 = vmatpush.xpose.msra.mxu0 0.0
        %463 = vmatpush.xpose.msra.mxu0 0.0
        %464 = vmatpush.xpose.msra.mxu0 0.0
        %465 = vmatpush.xpose.msra.mxu0 0.0
        %466 = vmatpush.xpose.msra.mxu0 0.0
        %467 = vmatpush.xpose.msra.mxu0 0.0
        %468 = vmatpush.xpose.msra.mxu0 0.0
        %469 = vmatpush.xpose.msra.mxu0 0.0
        %470 = vmatpush.xpose.msra.mxu0 0.0
        %471 = vmatpush.xpose.msra.mxu0 %v455
        %472 = vmatpush.xpose.msra.mxu0 %v452
        %473 = vmatmul.f32.gmra.mxu0 %v449
        %v474 = vpop.f32.mrf.mxu0
        %v475 = vadd.f32 0.0, %v474
        %476 = vdwg.mxu0
        %vm477 = vcmask 130048
        %v478 = vsel %vm477, %v475, -inf
        %479 = vmax.xlane.f32.xlu0 %v478
        %v480 = vpop.xlane.xlu0 %479
        %vm481 = vcmp.eq.f32.partialorder %v475, %v480
        %v482 = vsel %vm481, 1, 0
        %v483 = vcvt.s32.f32 %v482
        %v484 = vsel %vm477, %v483, 0.0
        %485 = vadd.xlane.f32.xlu0 %v484
        %v486 = vpop.xlane.xlu0 %485
        %v487 = vsel %vm481, -1e+30, %v475
        %v488 = vsel %vm477, %v487, -inf
        %489 = vmax.xlane.f32.xlu0 %v488
        %v490 = vpop.xlane.xlu0 %489
        %vm491 = vcmp.lt.f32.partialorder %v486, 2.0
        %v492 = vsel %vm491, %v490, %v480
        %vm493 = vcmp.lt.f32.partialorder %v475, %v492
        %v494 = vsel %vm493, -1e+30, %v475
        %v495 = vsub.f32 %v494, %v480
        %v496 = vmul.f32 %v495, 1.442695
        %v497 = vpow.pop %v496
        %v498 = vsel %vm477, %v497, 0.0
        %499 = vadd.xlane.f32.xlu0 %v498
        %v500 = vpop.xlane.xlu0 %499
        %v501 = vrcp.pop %v500
        %v502 = vmul.f32 %v497, %v501
        %503 = vrot.lane.b32.xlu0 %v445, 96
        %v504 = vpop.permute.xlu0 %503
        %505 = vrot.lane.b32.xlu0 %v446, 96
        %v506 = vpop.permute.xlu0 %505
        %v510 = vsel %vm477, %v502, 0
        %512 = vmatpush.msra.mxu0 0.0
        %513 = vmatpush.msra.mxu0 0.0
        %514 = vmatpush.msra.mxu0 0.0
        %515 = vmatpush.msra.mxu0 0.0
        %516 = vmatpush.msra.mxu0 0.0
        %517 = vmatpush.msra.mxu0 0.0
        %518 = vmatpush.msra.mxu0 0.0
        %519 = vmatpush.msra.mxu0 0.0
        %520 = vmatpush.msra.mxu0 0.0
        %521 = vmatpush.msra.mxu0 0.0
        %522 = vmatpush.msra.mxu0 0.0
        %523 = vmatpush.msra.mxu0 0.0
        %524 = vmatpush.msra.mxu0 0.0
        %525 = vmatpush.msra.mxu0 0.0
        %526 = vmatpush.msra.mxu0 %v506
        %527 = vmatpush.msra.mxu0 %v504
        %528 = vmatmul.f32.gmra.mxu0 %v510
        %v529 = vpop.f32.mrf.mxu0
        %v530 = vadd.f32 0.0, %v529
        %531 = vdwg.mxu0
        %532 = vst.msk [vmem:[#allocation3] sm:$0xff] %vm447, %v530
        %533 = vrot.lane.b32.xlu0 %v443, 120
        %v534 = vpop.permute.xlu0 %533
        %535 = vrot.lane.b32.xlu0 %v445, 120
        %v536 = vpop.permute.xlu0 %535
        %537 = vrot.lane.b32.xlu0 %v446, 120
        %v538 = vpop.permute.xlu0 %537
        %v539 = vsel %vm447, %v534, 0
        %v541 = vsel %vm447, %v536, 0
        %v543 = vsel %vm447, %v538, 0
        %545 = vmatpush.xpose.msra.mxu0 0.0
        %546 = vmatpush.xpose.msra.mxu0 0.0
        %547 = vmatpush.xpose.msra.mxu0 0.0
        %548 = vmatpush.xpose.msra.mxu0 0.0
        %549 = vmatpush.xpose.msra.mxu0 0.0
        %550 = vmatpush.xpose.msra.mxu0 0.0
        %551 = vmatpush.xpose.msra.mxu0 0.0
        %552 = vmatpush.xpose.msra.mxu0 0.0
        %553 = vmatpush.xpose.msra.mxu0 0.0
        %554 = vmatpush.xpose.msra.mxu0 0.0
        %555 = vmatpush.xpose.msra.mxu0 0.0
        %556 = vmatpush.xpose.msra.mxu0 0.0
        %557 = vmatpush.xpose.msra.mxu0 0.0
        %558 = vmatpush.xpose.msra.mxu0 0.0
        %559 = vmatpush.xpose.msra.mxu0 %v543
        %560 = vmatpush.xpose.msra.mxu0 %v541
        %561 = vmatmul.f32.gmra.mxu0 %v539
        %v562 = vpop.f32.mrf.mxu0
        %v563 = vadd.f32 0.0, %v562
        %564 = vdwg.mxu0
        %v565 = vsel %vm477, %v563, -inf
        %566 = vmax.xlane.f32.xlu0 %v565
        %v567 = vpop.xlane.xlu0 %566
        %vm568 = vcmp.eq.f32.partialorder %v563, %v567
        %v569 = vsel %vm568, 1, 0
        %v570 = vcvt.s32.f32 %v569
        %v571 = vsel %vm477, %v570, 0.0
        %572 = vadd.xlane.f32.xlu0 %v571
        %v573 = vpop.xlane.xlu0 %572
        %v574 = vsel %vm568, -1e+30, %v563
        %v575 = vsel %vm477, %v574, -inf
        %576 = vmax.xlane.f32.xlu0 %v575
        %v577 = vpop.xlane.xlu0 %576
        %vm578 = vcmp.lt.f32.partialorder %v573, 2.0
        %v579 = vsel %vm578, %v577, %v567
        %vm580 = vcmp.lt.f32.partialorder %v563, %v579
        %v581 = vsel %vm580, -1e+30, %v563
        %v582 = vsub.f32 %v581, %v567
        %v583 = vmul.f32 %v582, 1.442695
        %v584 = vpow.pop %v583
        %v585 = vsel %vm477, %v584, 0.0
        %586 = vadd.xlane.f32.xlu0 %v585
        %v587 = vpop.xlane.xlu0 %586
        %v588 = vrcp.pop %v587
        %v589 = vmul.f32 %v584, %v588
        %590 = vrot.lane.b32.xlu0 %v445, 88
        %v591 = vpop.permute.xlu0 %590
        %592 = vrot.lane.b32.xlu0 %v446, 88
        %v593 = vpop.permute.xlu0 %592
        %v597 = vsel %vm477, %v589, 0
        %599 = vmatpush.msra.mxu0 0.0
        %600 = vmatpush.msra.mxu0 0.0
        %601 = vmatpush.msra.mxu0 0.0
        %602 = vmatpush.msra.mxu0 0.0
        %603 = vmatpush.msra.mxu0 0.0
        %604 = vmatpush.msra.mxu0 0.0
        %605 = vmatpush.msra.mxu0 0.0
        %606 = vmatpush.msra.mxu0 0.0
        %607 = vmatpush.msra.mxu0 0.0
        %608 = vmatpush.msra.mxu0 0.0
        %609 = vmatpush.msra.mxu0 0.0
        %610 = vmatpush.msra.mxu0 0.0
        %611 = vmatpush.msra.mxu0 0.0
        %612 = vmatpush.msra.mxu0 0.0
        %613 = vmatpush.msra.mxu0 %v593
        %614 = vmatpush.msra.mxu0 %v591
        %615 = vmatmul.f32.gmra.mxu0 %v597
        %v616 = vpop.f32.mrf.mxu0
        %v617 = vadd.f32 0.0, %v616
        %618 = vdwg.mxu0
        %620 = vrot.lane.b32.xlu0 %v617, 8
        %v621 = vpop.permute.xlu0 %620
        %vm623 = vcmask 130112
        %624 = vst.msk [vmem:[#allocation3] sm:$0xff] %vm623, %v621
        %625 = vrot.lane.b32.xlu0 %v443, 112
        %v626 = vpop.permute.xlu0 %625
        %627 = vrot.lane.b32.xlu0 %v445, 112
        %v628 = vpop.permute.xlu0 %627
        %629 = vrot.lane.b32.xlu0 %v446, 112
        %v630 = vpop.permute.xlu0 %629
        %v631 = vsel %vm447, %v626, 0
        %v633 = vsel %vm447, %v628, 0
        %v635 = vsel %vm447, %v630, 0
        %637 = vmatpush.xpose.msra.mxu0 0.0
        %638 = vmatpush.xpose.msra.mxu0 0.0
        %639 = vmatpush.xpose.msra.mxu0 0.0
        %640 = vmatpush.xpose.msra.mxu0 0.0
        %641 = vmatpush.xpose.msra.mxu0 0.0
        %642 = vmatpush.xpose.msra.mxu0 0.0
        %643 = vmatpush.xpose.msra.mxu0 0.0
        %644 = vmatpush.xpose.msra.mxu0 0.0
        %645 = vmatpush.xpose.msra.mxu0 0.0
        %646 = vmatpush.xpose.msra.mxu0 0.0
        %647 = vmatpush.xpose.msra.mxu0 0.0
        %648 = vmatpush.xpose.msra.mxu0 0.0
        %649 = vmatpush.xpose.msra.mxu0 0.0
        %650 = vmatpush.xpose.msra.mxu0 0.0
        %651 = vmatpush.xpose.msra.mxu0 %v635
        %652 = vmatpush.xpose.msra.mxu0 %v633
        %653 = vmatmul.f32.gmra.mxu0 %v631
        %v654 = vpop.f32.mrf.mxu0
        %v655 = vadd.f32 0.0, %v654
        %656 = vdwg.mxu0
        %v657 = vsel %vm477, %v655, -inf
        %658 = vmax.xlane.f32.xlu0 %v657
        %v659 = vpop.xlane.xlu0 %658
        %vm660 = vcmp.eq.f32.partialorder %v655, %v659
        %v661 = vsel %vm660, 1, 0
        %v662 = vcvt.s32.f32 %v661
        %v663 = vsel %vm477, %v662, 0.0
        %664 = vadd.xlane.f32.xlu0 %v663
        %v665 = vpop.xlane.xlu0 %664
        %v666 = vsel %vm660, -1e+30, %v655
        %v667 = vsel %vm477, %v666, -inf
        %668 = vmax.xlane.f32.xlu0 %v667
        %v669 = vpop.xlane.xlu0 %668
        %vm670 = vcmp.lt.f32.partialorder %v665, 2.0
        %v671 = vsel %vm670, %v669, %v659
        %vm672 = vcmp.lt.f32.partialorder %v655, %v671
        %v673 = vsel %vm672, -1e+30, %v655
        %v674 = vsub.f32 %v673, %v659
        %v675 = vmul.f32 %v674, 1.442695
        %v676 = vpow.pop %v675
        %v677 = vsel %vm477, %v676, 0.0
        %678 = vadd.xlane.f32.xlu0 %v677
        %v679 = vpop.xlane.xlu0 %678
        %v680 = vrcp.pop %v679
        %v681 = vmul.f32 %v676, %v680
        %682 = vrot.lane.b32.xlu0 %v445, 80
        %v683 = vpop.permute.xlu0 %682
        %684 = vrot.lane.b32.xlu0 %v446, 80
        %v685 = vpop.permute.xlu0 %684
        %v689 = vsel %vm477, %v681, 0
        %691 = vmatpush.msra.mxu0 0.0
        %692 = vmatpush.msra.mxu0 0.0
        %693 = vmatpush.msra.mxu0 0.0
        %694 = vmatpush.msra.mxu0 0.0
        %695 = vmatpush.msra.mxu0 0.0
        %696 = vmatpush.msra.mxu0 0.0
        %697 = vmatpush.msra.mxu0 0.0
        %698 = vmatpush.msra.mxu0 0.0
        %699 = vmatpush.msra.mxu0 0.0
        %700 = vmatpush.msra.mxu0 0.0
        %701 = vmatpush.msra.mxu0 0.0
        %702 = vmatpush.msra.mxu0 0.0
        %703 = vmatpush.msra.mxu0 0.0
        %704 = vmatpush.msra.mxu0 0.0
        %705 = vmatpush.msra.mxu0 %v685
        %706 = vmatpush.msra.mxu0 %v683
        %707 = vmatmul.f32.gmra.mxu0 %v689
        %v708 = vpop.f32.mrf.mxu0
        %v709 = vadd.f32 0.0, %v708
        %710 = vdwg.mxu0
        %712 = vrot.lane.b32.xlu0 %v709, 16
        %v713 = vpop.permute.xlu0 %712
        %vm715 = vcmask 195712
        %716 = vst.msk [vmem:[#allocation3] sm:$0xff] %vm715, %v713
        %717 = vrot.lane.b32.xlu0 %v443, 104
        %v718 = vpop.permute.xlu0 %717
        %719 = vrot.lane.b32.xlu0 %v445, 104
        %v720 = vpop.permute.xlu0 %719
        %721 = vrot.lane.b32.xlu0 %v446, 104
        %v722 = vpop.permute.xlu0 %721
        %v723 = vsel %vm447, %v718, 0
        %v725 = vsel %vm447, %v720, 0
        %v727 = vsel %vm447, %v722, 0
        %729 = vmatpush.xpose.msra.mxu0 0.0
        %730 = vmatpush.xpose.msra.mxu0 0.0
        %731 = vmatpush.xpose.msra.mxu0 0.0
        %732 = vmatpush.xpose.msra.mxu0 0.0
        %733 = vmatpush.xpose.msra.mxu0 0.0
        %734 = vmatpush.xpose.msra.mxu0 0.0
        %735 = vmatpush.xpose.msra.mxu0 0.0
        %736 = vmatpush.xpose.msra.mxu0 0.0
        %737 = vmatpush.xpose.msra.mxu0 0.0
        %738 = vmatpush.xpose.msra.mxu0 0.0
        %739 = vmatpush.xpose.msra.mxu0 0.0
        %740 = vmatpush.xpose.msra.mxu0 0.0
        %741 = vmatpush.xpose.msra.mxu0 0.0
        %742 = vmatpush.xpose.msra.mxu0 0.0
        %743 = vmatpush.xpose.msra.mxu0 %v727
        %744 = vmatpush.xpose.msra.mxu0 %v725
        %745 = vmatmul.f32.gmra.mxu0 %v723
        %v746 = vpop.f32.mrf.mxu0
        %v747 = vadd.f32 0.0, %v746
        %748 = vdwg.mxu0
        %v749 = vsel %vm477, %v747, -inf
        %750 = vmax.xlane.f32.xlu0 %v749
        %v751 = vpop.xlane.xlu0 %750
        %vm752 = vcmp.eq.f32.partialorder %v747, %v751
        %v753 = vsel %vm752, 1, 0
        %v754 = vcvt.s32.f32 %v753
        %v755 = vsel %vm477, %v754, 0.0
        %756 = vadd.xlane.f32.xlu0 %v755
        %v757 = vpop.xlane.xlu0 %756
        %v758 = vsel %vm752, -1e+30, %v747
        %v759 = vsel %vm477, %v758, -inf
        %760 = vmax.xlane.f32.xlu0 %v759
        %v761 = vpop.xlane.xlu0 %760
        %vm762 = vcmp.lt.f32.partialorder %v757, 2.0
        %v763 = vsel %vm762, %v761, %v751
        %vm764 = vcmp.lt.f32.partialorder %v747, %v763
        %v765 = vsel %vm764, -1e+30, %v747
        %v766 = vsub.f32 %v765, %v751
        %v767 = vmul.f32 %v766, 1.442695
        %v768 = vpow.pop %v767
        %v769 = vsel %vm477, %v768, 0.0
        %770 = vadd.xlane.f32.xlu0 %v769
        %v771 = vpop.xlane.xlu0 %770
        %v772 = vrcp.pop %v771
        %v773 = vmul.f32 %v768, %v772
        %774 = vrot.lane.b32.xlu0 %v445, 72
        %v775 = vpop.permute.xlu0 %774
        %776 = vrot.lane.b32.xlu0 %v446, 72
        %v777 = vpop.permute.xlu0 %776
        %v781 = vsel %vm477, %v773, 0
        %783 = vmatpush.msra.mxu0 0.0
        %784 = vmatpush.msra.mxu0 0.0
        %785 = vmatpush.msra.mxu0 0.0
        %786 = vmatpush.msra.mxu0 0.0
        %787 = vmatpush.msra.mxu0 0.0
        %788 = vmatpush.msra.mxu0 0.0
        %789 = vmatpush.msra.mxu0 0.0
        %790 = vmatpush.msra.mxu0 0.0
        %791 = vmatpush.msra.mxu0 0.0
        %792 = vmatpush.msra.mxu0 0.0
        %793 = vmatpush.msra.mxu0 0.0
        %794 = vmatpush.msra.mxu0 0.0
        %795 = vmatpush.msra.mxu0 0.0
        %796 = vmatpush.msra.mxu0 0.0
        %797 = vmatpush.msra.mxu0 %v777
        %798 = vmatpush.msra.mxu0 %v775
        %799 = vmatmul.f32.gmra.mxu0 %v781
        %v800 = vpop.f32.mrf.mxu0
        %v801 = vadd.f32 0.0, %v800
        %802 = vdwg.mxu0
        %804 = vrot.lane.b32.xlu0 %v801, 24
        %v805 = vpop.permute.xlu0 %804
        %vm807 = vcmask 261312
        %808 = vst.msk [vmem:[#allocation3] sm:$0xff] %vm807, %v805
        %v809 = vld [vmem:[#allocation3] sm:$0xff]
        %v810 = vld [vmem:[#allocation10] sm:$0xff]
        %v811 = vld [vmem:[#allocation10 + $0x8] sm:$0xff]
        %v812 = vld [vmem:[#allocation10 + $0x10] sm:$0xff]
        %v813 = vld [vmem:[#allocation10 + $0x18] sm:$0xff]
        %v814 = vld [vmem:[%s6] sm:$0x1]
        %v816 = vperm.slane %v814, 0
        %v819 = vsel %vm421, %v809, 0
        %821 = vmatpush.msra.mxu0 0.0
        %822 = vmatpush.msra.mxu0 0.0
        %823 = vmatpush.msra.mxu0 0.0
        %824 = vmatpush.msra.mxu0 0.0
        %825 = vmatpush.msra.mxu0 0.0
        %826 = vmatpush.msra.mxu0 0.0
        %827 = vmatpush.msra.mxu0 0.0
        %828 = vmatpush.msra.mxu0 0.0
        %829 = vmatpush.msra.mxu0 0.0
        %830 = vmatpush.msra.mxu0 0.0
        %831 = vmatpush.msra.mxu0 0.0
        %832 = vmatpush.msra.mxu0 0.0
        %833 = vmatpush.msra.mxu0 %v813
        %834 = vmatpush.msra.mxu0 %v812
        %835 = vmatpush.msra.mxu0 %v811
        %836 = vmatpush.msra.mxu0 %v810
        %837 = vmatmul.f32.gmra.mxu0 %v819
        %v838 = vpop.f32.mrf.mxu0
        %v839 = vadd.f32 %v816, %v838
        %840 = vdwg.mxu0
        %841 = vst.msk [vmem:[%s362] sm:$0xff] %vm421, %v839
        %s842 = sand.u32 %s200, 1
        %s843 = scalar_lea.sflag [#allocation6], %s842
        %s844 = sand.u32 %s200, 1
        %s845 = smul.addr %s844, 8
        %s846 = scalar_lea.vmem [#allocation12], %s845
        // Predicated region
        $region69: #{tpu_custom_call.1} parent=47 // pred_check
          %p847 = pneg %p210
        $region70: #{tpu_custom_call.1} parent=47 // pred_check_branch
          %849 = sbr.rel (%p847) target = $region72
        $region71: #{tpu_custom_call.1} parent=47 // pred_region
          %851 = vsyncadd %s843, 0
          %s852 = smul.addr %s30, 2
          %s853 = sadd.s32 %s31, %s852
          %s854 = smul.addr %s853, 8
          %s855 = scalar_lea.hbm %s7, %s854
          %s857 = sshll.u32 %s846, 4
          %s858 = int_to_ptr.vmem [resolvable:$true] %s857
          %s859 = sshll.u32 %s855, 4
          %s860 = int_to_ptr.hbm [resolvable:$true] %s859
          %862 = dma.vmem_to_hbm [thread:$0]  %s858, 128, %s860, %s843
        $region72: #{tpu_custom_call.1} parent=47 // pred_fallthru
          _
      $region48: #{tpu_custom_call.1} parent=5 // pred_fallthru
        _
      %p863 = scmp.le.s32.totalorder 2, %s21
      // Predicated region
      $region73: #{tpu_custom_call.1} parent=5 // pred_check
        %p864 = pneg %p863
      $region74: #{tpu_custom_call.1} parent=5 // pred_check_branch
        %866 = sbr.rel (%p864) target = $region76
      $region75: #{tpu_custom_call.1} parent=5 // pred_region
        %s867 = ssub.s32 %s21, 2
        // Predicated region
        $region77: #{tpu_custom_call.1} parent=75 // pred_check
          %p868 = pneg %p216
        $region78: #{tpu_custom_call.1} parent=75 // pred_check_branch
          %870 = sbr.rel (%p868) target = $region80
        $region79: #{tpu_custom_call.1} parent=75 // pred_region
          %s871 = sand.u32 %s201, 1
          %s872 = scalar_lea.sflag [#allocation6], %s871
          %s873 = sand.u32 %s201, 1
          %s874 = smul.addr %s873, 8
          %s875 = scalar_lea.vmem [#allocation12], %s874
          %877 = dma.done %s872, 128
        $region80: #{tpu_custom_call.1} parent=75 // pred_fallthru
          _
      $region76: #{tpu_custom_call.1} parent=5 // pred_fallthru
        _
    $region6: #{tpu_custom_call.1} parent=1 // loop_footer
      %s25 = sadd.s32 1, %s21
    $region7: #{tpu_custom_call.1} parent=1 // loop_footer_branch
      %20 = sbr.rel target = $region3
    $region8: #{tpu_custom_call.1} parent=1 // loop_exit
      _
    %878 = vsyncpa [#allocation5], 1
    %s879 = scalar_lea.sflag [#allocation5], 1
    %880 = vsyncpa %s879, 1
    %881 = vsyncpa [#allocation8], 1
    %882 = vsyncpa [#allocation11], 1
    %883 = vsyncpa [#allocation6], 1
    %s884 = scalar_lea.sflag [#allocation6], 1
    %885 = vsyncpa %s884, 1

</llo_original>
